<compile_context>
chip_gen: v7x
topology: tpu7x:2x2x1
jax: 0.10.0
libtpu: 0.0.40
codegen_flags: <defaults>
</compile_context>

<pallas_src>
import jax
import jax.numpy as jnp
from jax.experimental import pallas as pl
from jax.experimental.pallas import tpu as pltpu


_TILE_QUANTUM = 256      # multiple of 128 lanes; even split across v7x's 2 TCs
_MAX_TILE = 131072       # caps double-buffered (x + out) VMEM at ~18 MiB
_DEFAULT_TILE = 65536    # ~1.8 MB HBM per grid step for f32 x (>> 0.35 us overhead)


# --------------------------------------------------------------- kernel -----
def mlp_kernel(x_ref, p_ref, o_ref):
    """x_ref: (6, tile_b) feature-major (batch on lanes). o_ref: (1, tile_b)."""
    x = x_ref[...]                    # (6, tile_b)
    cdt = x.dtype                     # compute dtype for the MXU (f32 or bf16)

    # Unpack parameters from the single packed (32, 16) f32 block.
    w1 = p_ref[0:16, 0:6].astype(cdt)     # (16, 6)  PyTorch (out, in) layout
    b1 = p_ref[0:16, 6:7]                 # (16, 1)  f32
    b2 = p_ref[0:14, 7:8]                 # (14, 1)  f32
    w2 = p_ref[16:30, 0:16].astype(cdt)   # (14, 16)
    w3 = p_ref[30:31, 0:14].astype(cdt)   # (1, 14)
    b3 = p_ref[30:31, 14:15]              # (1, 1)   f32

    # Every contraction is on the sublane axis of the rhs (natural MXU layout),
    # activations keep batch on lanes -> dense vregs for bias/ReLU/sigmoid and
    # an unmasked lane-dense output store.
    h1 = jnp.dot(w1, x, preferred_element_type=jnp.float32)               # (16, tb)
    h1 = jnp.maximum(h1 + b1, 0.0)
    h2 = jnp.dot(w2, h1.astype(cdt), preferred_element_type=jnp.float32)  # (14, tb)
    h2 = jnp.maximum(h2 + b2, 0.0)
    z = jnp.dot(w3, h2.astype(cdt), preferred_element_type=jnp.float32) + b3  # (1, tb)
    o_ref[...] = jax.nn.sigmoid(z).astype(o_ref.dtype)


# -------------------------------------------------------------- planner -----
def _plan(batch, requested):
    """Choose (tile_b, n_steps): tile multiple of 256, >=2 steps when B > 256."""
    req = int(min(max(int(requested), _TILE_QUANTUM), _MAX_TILE))
    n_steps = pl.cdiv(batch, req)
    if batch > _TILE_QUANTUM:
        n_steps = max(n_steps, 2)     # v7x TC sharding + keeps pipelining alive
    tile = pl.cdiv(pl.cdiv(batch, n_steps), _TILE_QUANTUM) * _TILE_QUANTUM
    return tile, n_steps


# -------------------------------------------------------------- wrappers ----
def mlp_forward_feature_major(x_t, packed_params, *, tile_b=_DEFAULT_TILE):
    """x_t: (6, B) feature-major, f32 or bf16 -> (B, 1) float32."""
    D, B = x_t.shape
    assert D == 6
    tile, n_steps = _plan(B, tile_b)
    Bp = tile * n_steps
    if Bp != B:
        x_t = jnp.pad(x_t, ((0, 0), (0, Bp - B)))   # padded samples sliced off below

    itemsize = jnp.dtype(x_t.dtype).itemsize
    # Double-buffered VMEM footprint (6 -> 8 sublane padding), plus params/slack.
    vmem_need = 2 * 8 * tile * itemsize + 2 * 8 * tile * 4 + (2 << 20)
    vmem_limit = int(min(max(2 * vmem_need, 32 << 20), 48 << 20))

    flops = 2 * Bp * (6 * 16 + 16 * 14 + 14 * 1)
    bytes_accessed = Bp * 6 * itemsize + Bp * 4 + packed_params.size * 4

    out = pl.pallas_call(
        mlp_kernel,
        out_shape=jax.ShapeDtypeStruct((1, Bp), jnp.float32),
        grid_spec=pltpu.PrefetchScalarGridSpec(
            num_scalar_prefetch=0,
            grid=(n_steps,),
            in_specs=[
                pl.BlockSpec((6, tile), lambda i: (0, i)),    # lane-dense x stream
                pl.BlockSpec((32, 16), lambda i: (0, 0)),     # packed params
            ],
            out_specs=pl.BlockSpec((1, tile), lambda i: (0, i)),  # lane-dense out
        ),
        compiler_params=pltpu.CompilerParams(
            dimension_semantics=("parallel",),
            vmem_limit_bytes=vmem_limit),
        cost_estimate=pl.CostEstimate(
            flops=flops, transcendentals=Bp, bytes_accessed=bytes_accessed),
    )(x_t, packed_params)

    return out[0, :B].reshape(B, 1)


def mlp_forward(x, packed_params, *, tile_b=_DEFAULT_TILE):
    """Module-semantics entry point. x: (B, 6) float32/bfloat16 -> (B, 1) float32.

    Transposes once to feature-major (6, B) outside the kernel (~2x extra HBM
    traffic for x); producers that can emit (6, B) directly should call
    mlp_forward_feature_major() instead.
    """
    B, D = x.shape
    assert D == 6
    return mlp_forward_feature_major(x.T, packed_params, tile_b=tile_b)


# ---------------------------------------------------- params / reference ----
def init_params(key):
    """PyTorch-style init: U(-1/sqrt(fan_in), 1/sqrt(fan_in)); weights (out,in)."""
    def linear(k, fan_in, fan_out):
        kw, kb = jax.random.split(k)
        bound = float(fan_in) ** -0.5
        w = jax.random.uniform(kw, (fan_out, fan_in), jnp.float32, -bound, bound)
        b = jax.random.uniform(kb, (fan_out,), jnp.float32, -bound, bound)
        return w, b
    k1, k2, k3 = jax.random.split(key, 3)
    return (linear(k1, 6, 16), linear(k2, 16, 14), linear(k3, 14, 1))


def pack_params(params):
    """Pack all 6 tensors (<2 KiB total) into one (32,16) f32 block (single DMA)."""
    (w1, b1), (w2, b2), (w3, b3) = params
    p = jnp.zeros((32, 16), jnp.float32)
    p = p.at[0:16, 0:6].set(w1)      # (16, 6)
    p = p.at[0:16, 6].set(b1)        # (16,)
    p = p.at[0:14, 7].set(b2)        # (14,)
    p = p.at[16:30, 0:16].set(w2)    # (14, 16)
    p = p.at[30, 0:14].set(w3[0])    # (14,)
    p = p.at[30, 14].set(b3[0])      # ()
    return p


def ref_forward(x, params):
    (w1, b1), (w2, b2), (w3, b3) = params
    hp = jax.lax.Precision.HIGHEST
    h = jnp.maximum(jnp.dot(x, w1.T, precision=hp) + b1, 0.0)
    h = jnp.maximum(jnp.dot(h, w2.T, precision=hp) + b2, 0.0)
    return jax.nn.sigmoid(jnp.dot(h, w3.T, precision=hp) + b3)


# ----------------------------------------------------------------- main -----
if __name__ == "__main__":
    key = jax.random.PRNGKey(0)
    k_param, k_x = jax.random.split(key)

    params = init_params(k_param)
    packed = pack_params(params)

    B = 512                                         # small demo batch
    x = jax.random.normal(k_x, (B, 6), jnp.float32)
    ref = ref_forward(x, params)

    # f32 path: planner picks tile=256, grid=2 (both TCs on v7x)
    out = jax.block_until_ready(mlp_forward(x, packed, tile_b=256))
    assert out.shape == (B, 1)
    assert jnp.allclose(out, ref, atol=5e-3), "f32 mismatch vs reference"

    # bf16-activation path (halves x HBM traffic; f32 accumulation in-kernel)
    out_bf16 = jax.block_until_ready(
        mlp_forward(x.astype(jnp.bfloat16), packed, tile_b=256))
    assert jnp.allclose(out_bf16, ref, atol=3e-2), "bf16 mismatch vs reference"

    # ragged batch: padded to grid*tile (zeros), result sliced back
    out_ragged = jax.block_until_ready(mlp_forward(x[:300], packed))
    assert jnp.allclose(out_ragged, ref[:300], atol=5e-3), "ragged-batch mismatch"

    # tiny batch: single padded 256-sample tile
    out_small = jax.block_until_ready(mlp_forward(x[:8], packed))
    assert jnp.allclose(out_small, ref[:8], atol=5e-3), "small-batch mismatch"

    print("KERNEL_OK")
</pallas_src>

<mosaic_0001>
module attributes {stable_mosaic.version = 11 : i64} {
  func.func @mlp_kernel(%arg0: i32, %arg1: memref<6x256xf32, #tpu.memory_space<vmem>>, %arg2: memref<32x16xf32, #tpu.memory_space<vmem>>, %arg3: memref<1x256xf32, #tpu.memory_space<vmem>>) attributes {dimension_semantics = [#tpu.dimension_semantics<parallel>], iteration_bounds = array<i64: 2>, scalar_prefetch = 0 : i64, scratch_operands = 0 : i64, tpu.core_type = #tpu.core_type<tc>, window_params = [{transform_indices = @transform_0, window_bounds = array<i64: 6, 256>}, {pipeline_mode = #tpu.pipeline_mode<synchronous>, transform_indices = @transform_1, window_bounds = array<i64: 32, 16>}, {transform_indices = @transform_2, window_bounds = array<i64: 1, 256>}]} {
    %c0 = arith.constant 0 : index
    %c0_0 = arith.constant 0 : index
    %0 = vector.load %arg1[%c0, %c0_0] : memref<6x256xf32, #tpu.memory_space<vmem>>, vector<6x256xf32>
    %c0_1 = arith.constant 0 : index
    %c0_2 = arith.constant 0 : index
    %1 = vector.load %arg2[%c0_1, %c0_2] : memref<32x16xf32, #tpu.memory_space<vmem>>, vector<16x6xf32>
    %c0_3 = arith.constant 0 : index
    %c6 = arith.constant 6 : index
    %2 = vector.load %arg2[%c0_3, %c6] : memref<32x16xf32, #tpu.memory_space<vmem>>, vector<16x1xf32>
    %c0_4 = arith.constant 0 : index
    %c7 = arith.constant 7 : index
    %3 = vector.load %arg2[%c0_4, %c7] : memref<32x16xf32, #tpu.memory_space<vmem>>, vector<14x1xf32>
    %c16 = arith.constant 16 : index
    %c0_5 = arith.constant 0 : index
    %4 = vector.load %arg2[%c16, %c0_5] : memref<32x16xf32, #tpu.memory_space<vmem>>, vector<14x16xf32>
    %c30 = arith.constant 30 : index
    %c0_6 = arith.constant 0 : index
    %5 = vector.load %arg2[%c30, %c0_6] : memref<32x16xf32, #tpu.memory_space<vmem>>, vector<1x14xf32>
    %c30_7 = arith.constant 30 : index
    %c14 = arith.constant 14 : index
    %6 = vector.load %arg2[%c30_7, %c14] : memref<32x16xf32, #tpu.memory_space<vmem>>, vector<1x1xf32>
    %cst = arith.constant dense<0.000000e+00> : vector<16x256xf32>
    %7 = tpu.matmul %1, %0, %cst {dimension_numbers = #tpu.dot_dimension_numbers<[1], [0], [0], [1], [0, 0, 1, 1], [], []>} : vector<16x6xf32>, vector<6x256xf32>, vector<16x256xf32> -> vector<16x256xf32>
    %8 = vector.broadcast %2 : vector<16x1xf32> to vector<16x256xf32>
    %9 = arith.addf %7, %8 : vector<16x256xf32>
    %cst_8 = arith.constant 0.000000e+00 : f32
    %10 = vector.broadcast %cst_8 : f32 to vector<16x256xf32>
    %11 = arith.maximumf %9, %10 : vector<16x256xf32>
    %cst_9 = arith.constant dense<0.000000e+00> : vector<14x256xf32>
    %12 = tpu.matmul %4, %11, %cst_9 {dimension_numbers = #tpu.dot_dimension_numbers<[1], [0], [0], [1], [0, 0, 1, 1], [], []>} : vector<14x16xf32>, vector<16x256xf32>, vector<14x256xf32> -> vector<14x256xf32>
    %13 = vector.broadcast %3 : vector<14x1xf32> to vector<14x256xf32>
    %14 = arith.addf %12, %13 : vector<14x256xf32>
    %cst_10 = arith.constant 0.000000e+00 : f32
    %15 = vector.broadcast %cst_10 : f32 to vector<14x256xf32>
    %16 = arith.maximumf %14, %15 : vector<14x256xf32>
    %cst_11 = arith.constant dense<0.000000e+00> : vector<1x256xf32>
    %17 = tpu.matmul %5, %16, %cst_11 {dimension_numbers = #tpu.dot_dimension_numbers<[1], [0], [0], [1], [0, 0, 1, 1], [], []>} : vector<1x14xf32>, vector<14x256xf32>, vector<1x256xf32> -> vector<1x256xf32>
    %18 = vector.broadcast %6 : vector<1x1xf32> to vector<1x256xf32>
    %19 = arith.addf %17, %18 : vector<1x256xf32>
    %20 = arith.negf %19 : vector<1x256xf32>
    %21 = math.exp %20 : vector<1x256xf32>
    %cst_12 = arith.constant 1.000000e+00 : f32
    %22 = vector.broadcast %cst_12 : f32 to vector<1x256xf32>
    %23 = arith.addf %22, %21 : vector<1x256xf32>
    %24 = arith.divf %22, %23 : vector<1x256xf32>
    %c0_13 = arith.constant 0 : index
    %c0_14 = arith.constant 0 : index
    %25 = vector.load %arg3[%c0_13, %c0_14] : memref<1x256xf32, #tpu.memory_space<vmem>>, vector<1x256xf32>
    tpu.vector_store %arg3[%c0_13, %c0_14], %24 {strides = array<i32>} : memref<1x256xf32, #tpu.memory_space<vmem>>, vector<1x256xf32>,
    return
  }
  func.func @transform_0(%arg0: i32) -> (i32, i32) {
    %c0_i32 = arith.constant 0 : i32
    %c0_i32_0 = arith.constant 0 : i32
    return %c0_i32, %arg0 : i32, i32
  }
  func.func @transform_1(%arg0: i32) -> (i32, i32) {
    %c0_i32 = arith.constant 0 : i32
    %c0_i32_0 = arith.constant 0 : i32
    %c0_i32_1 = arith.constant 0 : i32
    return %c0_i32, %c0_i32_0 : i32, i32
  }
  func.func @transform_2(%arg0: i32) -> (i32, i32) {
    %c0_i32 = arith.constant 0 : i32
    %c0_i32_0 = arith.constant 0 : i32
    return %c0_i32, %arg0 : i32, i32
  }
}

</mosaic_0001>

<llo_original>
// kernel: tpu_custom_call.1
$region0: #{tpu_custom_call.1}
  #allocation0 [shape = 'u32[]', space=smem, size = 0x4, offset = 0x4, fixed_abs, tag = 'smem constant byte address 0x4 - core index']
  #allocation1 [shape = 'u32[144,128]{1,0:T(1,128)}', space=vmem, size = 0x12000, scoped, tag = 'internal scratch']
  %s0 = inlined_call_operand.vmem [shape: f32[6,512], index: 0, kind: input, shape index: {}]
  %s1 = inlined_call_operand.vmem [shape: f32[32,16], index: 1, kind: input, shape index: {}]
  %s2 = inlined_call_operand.hbm [shape: f32[1,512], index: 2, kind: output, shape index: {}]
  %s3 = sld [smem:[#allocation0]]
  $region41: #{tpu_custom_call.1} parent=0
    _
  %s5 = ssub.s32 1, %s3
  %s6 = scalar_select 0, %s5, %s3
  $region1: #{tpu_custom_call.1} parent=0
    #allocation2 [shape = 'u8[2048]{0}', space=vmem, size = 0x800, scoped, tag = 'output window, operand 0']
    #allocation3 [shape = 's32[2]{0}', space=sflag, size = 0x8, scoped, tag = 'scoped memory for tpu_custom_call.1']
    %7 = vsyncpa [#allocation3], 0
    %s8 = scalar_lea.sflag [#allocation3], 1
    %9 = vsyncpa %s8, 0
    loop: start=0, step=1, limit=4
    $region2: #{tpu_custom_call.1} parent=1 // loop_pre_header
      _
    $region3: #{tpu_custom_call.1} parent=1 // loop_header
      %s11 = sphi 0, %s15
      %p12 = scmp.ge.s32.totalorder %s11, 4
      %s21 = sphi 0, %s23
      %s24 = sphi 0, %s21
      %s25 = sphi 0, %s24
      %s41 = sphi 0, %s25
      %s45 = sphi 0, %s45
      %s47 = sphi 0, %s45
      %s48 = sphi 0, %s47
      %s62 = sphi 0, %s48
      %s68 = sphi 0, %s70
      %s71 = sphi 0, %s68
      %s72 = sphi 0, %s71
      %s88 = sphi 0, %s72
    $region4: #{tpu_custom_call.1} parent=1 // loop_header_branch
      %14 = sbr.rel (%p12) target = $region8
    $region5: #{tpu_custom_call.1} parent=1 // loop_body
      %s16 = ssub.s32 %s11, 1
      %s17 = ssub.s32 %s11, 2
      %s18 = sadd.s32 %s11, 1
      %s19 = ssub.s32 %s11, %s18
      %p20 = scmp.eq.s32.totalorder %s19, 0
      %s22 = sadd.s32 %s21, 1
      %s23 = scalar_select %p20, %s21, %s22
      %p26 = pneg %p20
      %p27 = scmp.eq.s32.totalorder %s11, 1
      %p28 = por %p26, %p27
      %p29 = scmp.ne.s32.totalorder %s21, %s24
      %p30 = scmp.eq.s32.totalorder %s11, 0
      %p31 = por %p29, %p30
      %p32 = scmp.ne.s32.totalorder %s21, %s24
      %p33 = scmp.eq.s32.totalorder %s16, 1
      %p34 = por %p32, %p33
      %p35 = scmp.ne.s32.totalorder %s24, %s25
      %p36 = scmp.eq.s32.totalorder %s16, 0
      %p37 = por %p35, %p36
      %p38 = scmp.ne.s32.totalorder %s24, %s25
      %p39 = scmp.eq.s32.totalorder %s17, 1
      %p40 = por %p38, %p39
      %p42 = scmp.ne.s32.totalorder %s25, %s41
      %p43 = scmp.eq.s32.totalorder %s17, 0
      %p44 = por %p42, %p43
      %s46 = sadd.s32 %s45, 1
      %p49 = scmp.eq.s32.totalorder %s11, 1
      %p50 = scmp.ne.s32.totalorder %s45, %s47
      %p51 = scmp.eq.s32.totalorder %s11, 0
      %p52 = por %p50, %p51
      %p53 = scmp.ne.s32.totalorder %s45, %s47
      %p54 = scmp.eq.s32.totalorder %s16, 1
      %p55 = por %p53, %p54
      %p56 = scmp.ne.s32.totalorder %s47, %s48
      %p57 = scmp.eq.s32.totalorder %s16, 0
      %p58 = por %p56, %p57
      %p59 = scmp.ne.s32.totalorder %s47, %s48
      %p60 = scmp.eq.s32.totalorder %s17, 1
      %p61 = por %p59, %p60
      %p63 = scmp.ne.s32.totalorder %s48, %s62
      %p64 = scmp.eq.s32.totalorder %s17, 0
      %p65 = por %p63, %p64
      %s66 = ssub.s32 %s11, %s18
      %p67 = scmp.eq.s32.totalorder %s66, 0
      %s69 = sadd.s32 %s68, 1
      %s70 = scalar_select %p67, %s68, %s69
      %p73 = pneg %p67
      %p74 = scmp.eq.s32.totalorder %s11, 1
      %p75 = por %p73, %p74
      %p76 = scmp.ne.s32.totalorder %s68, %s71
      %p77 = scmp.eq.s32.totalorder %s11, 0
      %p78 = por %p76, %p77
      %p79 = scmp.ne.s32.totalorder %s68, %s71
      %p80 = scmp.eq.s32.totalorder %s16, 1
      %p81 = por %p79, %p80
      %p82 = scmp.ne.s32.totalorder %s71, %s72
      %p83 = scmp.eq.s32.totalorder %s16, 0
      %p84 = por %p82, %p83
      %p85 = scmp.ne.s32.totalorder %s71, %s72
      %p86 = scmp.eq.s32.totalorder %s17, 1
      %p87 = por %p85, %p86
      %p89 = scmp.ne.s32.totalorder %s72, %s88
      %p90 = scmp.eq.s32.totalorder %s17, 0
      %p91 = por %p89, %p90
      %p92 = scmp.le.s32.totalorder 1, %s11
      %p93 = scmp.lt.s32.totalorder %s11, 3
      %p94 = pnand %p92, %p93
      %p95 = pneg %p94
      // Predicated region
      $region9: #{tpu_custom_call.1} parent=5 // pred_check
        _
      $region10: #{tpu_custom_call.1} parent=5 // pred_check_branch
        %97 = sbr.rel (%p94) target = $region12
      $region11: #{tpu_custom_call.1} parent=5 // pred_region
        %s98 = ssub.s32 %s11, 1
        // Predicated region
        $region13: #{tpu_custom_call.1} parent=11 // pred_check
          %p99 = pneg %p58
        $region14: #{tpu_custom_call.1} parent=11 // pred_check_branch
          %101 = sbr.rel (%p99) target = $region16
        $region15: #{tpu_custom_call.1} parent=11 // pred_region
          _
        $region16: #{tpu_custom_call.1} parent=11 // pred_fallthru
          _
      $region12: #{tpu_custom_call.1} parent=5 // pred_fallthru
        _
      %p102 = scmp.lt.s32.totalorder %s11, 2
      // Predicated region
      $region17: #{tpu_custom_call.1} parent=5 // pred_check
        %p103 = pneg %p102
      $region18: #{tpu_custom_call.1} parent=5 // pred_check_branch
        %105 = sbr.rel (%p103) target = $region20
      $region19: #{tpu_custom_call.1} parent=5 // pred_region
        // Predicated region
        $region21: #{tpu_custom_call.1} parent=19 // pred_check
          %p106 = pneg %p31
        $region22: #{tpu_custom_call.1} parent=19 // pred_check_branch
          %108 = sbr.rel (%p106) target = $region24
        $region23: #{tpu_custom_call.1} parent=19 // pred_region
          %s109 = smul.u32 2, %s11
          %p110 = scmp.lt.s32.totalorder %s109, 3
          %s111 = scalar_select %p110, %s109, 3
          %s112 = smul.addr %s111, 8
          %s113 = scalar_lea.vmem %s0, %s112
          %s114 = smul.u32 2, %s11
        $region24: #{tpu_custom_call.1} parent=19 // pred_fallthru
          _
      $region20: #{tpu_custom_call.1} parent=5 // pred_fallthru
        _
      %p115 = scmp.le.s32.totalorder 1, %s11
      %p116 = scmp.lt.s32.totalorder %s11, 3
      %p117 = pnand %p115, %p116
      %p118 = pneg %p117
      // Predicated region
      $region25: #{tpu_custom_call.1} parent=5 // pred_check
        _
      $region26: #{tpu_custom_call.1} parent=5 // pred_check_branch
        %120 = sbr.rel (%p117) target = $region28
      $region27: #{tpu_custom_call.1} parent=5 // pred_region
        %s121 = ssub.s32 %s11, 1
        %s122 = smul.u32 2, %s16
        %p123 = scmp.lt.s32.totalorder %s122, 3
        %s124 = scalar_select %p123, %s122, 3
        %s125 = smul.addr %s124, 8
        %s126 = scalar_lea.vmem %s0, %s125
        %p127 = pneg %p37
        %p128 = pneg %p34
        %p129 = pneg %p58
        %p130 = pneg %p55
        %p131 = pneg %p84
        %p132 = pneg %p81
        %s133 = sand.u32 %s71, 1
        %s134 = scalar_lea.sflag [#allocation3], %s133
        %s135 = sand.u32 %s71, 1
        %s136 = smul.addr %s135, 2
        %s137 = scalar_lea.vmem [#allocation2], %s136
        %s138 = smul.u32 2, %s16
        %p139 = scmp.lt.s32.totalorder %s138, 3
        %s140 = scalar_select %p139, %s138, 3
        %s141 = smul.addr %s140, 8
        %s142 = scalar_lea.vmem %s0, %s141
        %s143 = smul.u32 2, %s16
        %s144 = smul.u32 2, %s16
        %v145 = vld [vmem:[%s142] sm:$0x3f]
        %v146 = vld [vmem:[%s142 + $0x8] sm:$0x3f]
        %v147 = vld [vmem:[%s1] sm:$0xff]
        %v148 = vld [vmem:[%s1 + $0x8] sm:$0xff]
        %v149 = vld [vmem:[%s1 + $0x8] sm:$0x3f]
        %v150 = vld [vmem:[%s1 + $0x10] sm:$0xff]
        %v151 = vld [vmem:[%s1 + $0x18] sm:$0x3f]
        %v152 = vld [vmem:[%s1 + $0x1e] sm:$0x1]
        %154 = vset.pattern.permute.xlu0 6
        %155 = vperm.xlu0 %154, %v147
        %v156 = vpop.permute.xlu0 %155
        %159 = vset.pattern.permute.xlu0 6
        %160 = vperm.xlu0 %159, %v148
        %v161 = vpop.permute.xlu0 %160
        %vm163 = vcmask 48128
        %v164 = vsel %vm163, %v147, 0
        %v166 = vsel %vm163, %v148, 0
        %vm168 = vcmask 1045504
        %v170 = vsel %vm168, %v145, 0
        %v173 = vsel %vm168, %v146, 0
        %175 = vmatprep.subr.mxu0 %v173
        %176 = vmatpush1.msra.mxu0 %v170
        %177 = vmatprep.subr.mxu0 0.0
        %178 = vmatpush1.msra.mxu0 0.0
        %179 = vmatprep.subr.mxu0 0.0
        %180 = vmatpush1.msra.mxu0 0.0
        %181 = vmatprep.subr.mxu0 0.0
        %182 = vmatpush1.msra.mxu0 0.0
        %183 = vmatprep.subr.mxu0 0.0
        %184 = vmatpush1.msra.mxu0 0.0
        %185 = vmatprep.subr.mxu0 0.0
        %186 = vmatpush1.msra.mxu0 0.0
        %187 = vmatprep.subr.mxu0 0.0
        %188 = vmatpush1.msra.mxu0 0.0
        %189 = vmatprep.subr.mxu0 0.0
        %190 = vmatpush1.msra.mxu0 0.0
        %191 = vmatprep.subr.mxu0 0.0
        %192 = vmatpush1.msra.mxu0 0.0
        %193 = vmatprep.subr.mxu0 0.0
        %194 = vmatpush1.msra.mxu0 0.0
        %195 = vmatprep.subr.mxu0 0.0
        %196 = vmatpush1.msra.mxu0 0.0
        %197 = vmatprep.subr.mxu0 0.0
        %198 = vmatpush1.msra.mxu0 0.0
        %199 = vmatprep.subr.mxu0 0.0
        %200 = vmatpush1.msra.mxu0 0.0
        %201 = vmatprep.subr.mxu0 0.0
        %202 = vmatpush1.msra.mxu0 0.0
        %203 = vmatprep.subr.mxu0 0.0
        %204 = vmatpush1.msra.mxu0 0.0
        %205 = vmatprep.subr.mxu0 0.0
        %206 = vmatpush1.msra.mxu0 0.0
        %207 = vmatprep.subr.mxu0 0.0
        %208 = vmatpush1.msra.mxu0 0.0
        %209 = vmatprep.subr.mxu0 0.0
        %210 = vmatpush1.msra.mxu0 0.0
        %211 = vmatprep.subr.mxu0 0.0
        %212 = vmatpush1.msra.mxu0 0.0
        %213 = vmatprep.subr.mxu0 0.0
        %214 = vmatpush1.msra.mxu0 0.0
        %215 = vmatprep.subr.mxu0 0.0
        %216 = vmatpush1.msra.mxu0 0.0
        %217 = vmatprep.subr.mxu0 0.0
        %218 = vmatpush1.msra.mxu0 0.0
        %219 = vmatprep.subr.mxu0 0.0
        %220 = vmatpush1.msra.mxu0 0.0
        %221 = vmatprep.subr.mxu0 0.0
        %222 = vmatpush1.msra.mxu0 0.0
        %223 = vmatprep.subr.mxu0 0.0
        %224 = vmatpush1.msra.mxu0 0.0
        %225 = vmatprep.subr.mxu0 0.0
        %226 = vmatpush1.msra.mxu0 0.0
        %227 = vmatprep.subr.mxu0 0.0
        %228 = vmatpush1.msra.mxu0 0.0
        %229 = vmatprep.subr.mxu0 0.0
        %230 = vmatpush1.msra.mxu0 0.0
        %231 = vmatprep.subr.mxu0 0.0
        %232 = vmatpush1.msra.mxu0 0.0
        %233 = vmatprep.subr.mxu0 0.0
        %234 = vmatpush1.msra.mxu0 0.0
        %235 = vmatprep.subr.mxu0 0.0
        %236 = vmatpush1.msra.mxu0 0.0
        %237 = vmatprep.subr.mxu0 0.0
        %238 = vmatpush1.msra.mxu0 0.0
        %239 = vmatprep.mubr.f32.mxu0 0.0
        %240 = vmatmul.mubr.f32.gmra.mrb[0].mxu0 %v164
        %v241 = vpop.f32.mrb[0].mxu0
        %v242 = vadd.f32 %v156, %v241
        %v243 = vpop.f32.mrb[0].mxu0
        %v244 = vadd.f32 %v156, %v243
        %245 = vmatprep.mubr.f32.mxu0 0.0
        %246 = vmatmul.mubr.f32.gmra.mrb[0].mxu0 %v166
        %v247 = vpop.f32.mrb[0].mxu0
        %v248 = vadd.f32 %v161, %v247
        %v249 = vpop.f32.mrb[0].mxu0
        %v250 = vadd.f32 %v161, %v249
        %251 = vdwg.mxu0
        %v252 = vmax.f32 %v242, 0.0
        %v253 = vmax.f32 %v244, 0.0
        %v254 = vmax.f32 %v248, 0.0
        %v255 = vmax.f32 %v250, 0.0
        %256 = vset.pattern.permute.xlu0 7
        %257 = vperm.xlu0 %256, %v147
        %v258 = vpop.permute.xlu0 %257
        %261 = vset.pattern.permute.xlu0 7
        %262 = vperm.xlu0 %261, %v149
        %v263 = vpop.permute.xlu0 %262
        %vm265 = vcmask 130048
        %v267 = vsel %vm265, %v150, 0
        %v270 = vsel %vm265, %v151, 0
        %272 = vmatprep.subr.mxu0 %v253
        %273 = vmatpush1.msra.mxu0 %v252
        %274 = vmatprep.subr.mxu0 %v255
        %275 = vmatpush1.msra.mxu0 %v254
        %276 = vmatprep.subr.mxu0 0.0
        %277 = vmatpush1.msra.mxu0 0.0
        %278 = vmatprep.subr.mxu0 0.0
        %279 = vmatpush1.msra.mxu0 0.0
        %280 = vmatprep.subr.mxu0 0.0
        %281 = vmatpush1.msra.mxu0 0.0
        %282 = vmatprep.subr.mxu0 0.0
        %283 = vmatpush1.msra.mxu0 0.0
        %284 = vmatprep.subr.mxu0 0.0
        %285 = vmatpush1.msra.mxu0 0.0
        %286 = vmatprep.subr.mxu0 0.0
        %287 = vmatpush1.msra.mxu0 0.0
        %288 = vmatprep.subr.mxu0 0.0
        %289 = vmatpush1.msra.mxu0 0.0
        %290 = vmatprep.subr.mxu0 0.0
        %291 = vmatpush1.msra.mxu0 0.0
        %292 = vmatprep.subr.mxu0 0.0
        %293 = vmatpush1.msra.mxu0 0.0
        %294 = vmatprep.subr.mxu0 0.0
        %295 = vmatpush1.msra.mxu0 0.0
        %296 = vmatprep.subr.mxu0 0.0
        %297 = vmatpush1.msra.mxu0 0.0
        %298 = vmatprep.subr.mxu0 0.0
        %299 = vmatpush1.msra.mxu0 0.0
        %300 = vmatprep.subr.mxu0 0.0
        %301 = vmatpush1.msra.mxu0 0.0
        %302 = vmatprep.subr.mxu0 0.0
        %303 = vmatpush1.msra.mxu0 0.0
        %304 = vmatprep.subr.mxu0 0.0
        %305 = vmatpush1.msra.mxu0 0.0
        %306 = vmatprep.subr.mxu0 0.0
        %307 = vmatpush1.msra.mxu0 0.0
        %308 = vmatprep.subr.mxu0 0.0
        %309 = vmatpush1.msra.mxu0 0.0
        %310 = vmatprep.subr.mxu0 0.0
        %311 = vmatpush1.msra.mxu0 0.0
        %312 = vmatprep.subr.mxu0 0.0
        %313 = vmatpush1.msra.mxu0 0.0
        %314 = vmatprep.subr.mxu0 0.0
        %315 = vmatpush1.msra.mxu0 0.0
        %316 = vmatprep.subr.mxu0 0.0
        %317 = vmatpush1.msra.mxu0 0.0
        %318 = vmatprep.subr.mxu0 0.0
        %319 = vmatpush1.msra.mxu0 0.0
        %320 = vmatprep.subr.mxu0 0.0
        %321 = vmatpush1.msra.mxu0 0.0
        %322 = vmatprep.subr.mxu0 0.0
        %323 = vmatpush1.msra.mxu0 0.0
        %324 = vmatprep.subr.mxu0 0.0
        %325 = vmatpush1.msra.mxu0 0.0
        %326 = vmatprep.subr.mxu0 0.0
        %327 = vmatpush1.msra.mxu0 0.0
        %328 = vmatprep.subr.mxu0 0.0
        %329 = vmatpush1.msra.mxu0 0.0
        %330 = vmatprep.subr.mxu0 0.0
        %331 = vmatpush1.msra.mxu0 0.0
        %332 = vmatprep.subr.mxu0 0.0
        %333 = vmatpush1.msra.mxu0 0.0
        %334 = vmatprep.subr.mxu0 0.0
        %335 = vmatpush1.msra.mxu0 0.0
        %336 = vmatprep.mubr.f32.mxu0 0.0
        %337 = vmatmul.mubr.f32.gmra.mrb[0].mxu0 %v267
        %v338 = vpop.f32.mrb[0].mxu0
        %v339 = vadd.f32 %v258, %v338
        %v340 = vpop.f32.mrb[0].mxu0
        %v341 = vadd.f32 %v258, %v340
        %342 = vmatprep.mubr.f32.mxu0 0.0
        %343 = vmatmul.mubr.f32.gmra.mrb[0].mxu0 %v270
        %v344 = vpop.f32.mrb[0].mxu0
        %v345 = vadd.f32 %v263, %v344
        %v346 = vpop.f32.mrb[0].mxu0
        %v347 = vadd.f32 %v263, %v346
        %348 = vdwg.mxu0
        %v349 = vmax.f32 %v339, 0.0
        %v350 = vmax.f32 %v341, 0.0
        %v351 = vmax.f32 %v345, 0.0
        %v352 = vmax.f32 %v347, 0.0
        %354 = vset.pattern.permute.xlu0 14
        %355 = vperm.xlu0 %354, %v152
        %v356 = vpop.permute.xlu0 %355
        %vm358 = vcmask 113664
        %v359 = vsel %vm358, %v152, 0
        %v362 = vsel %vm168, %v351, 0
        %v365 = vsel %vm168, %v352, 0
        %367 = vmatprep.subr.mxu0 %v350
        %368 = vmatpush1.msra.mxu0 %v349
        %369 = vmatprep.subr.mxu0 %v365
        %370 = vmatpush1.msra.mxu0 %v362
        %371 = vmatprep.subr.mxu0 0.0
        %372 = vmatpush1.msra.mxu0 0.0
        %373 = vmatprep.subr.mxu0 0.0
        %374 = vmatpush1.msra.mxu0 0.0
        %375 = vmatprep.subr.mxu0 0.0
        %376 = vmatpush1.msra.mxu0 0.0
        %377 = vmatprep.subr.mxu0 0.0
        %378 = vmatpush1.msra.mxu0 0.0
        %379 = vmatprep.subr.mxu0 0.0
        %380 = vmatpush1.msra.mxu0 0.0
        %381 = vmatprep.subr.mxu0 0.0
        %382 = vmatpush1.msra.mxu0 0.0
        %383 = vmatprep.subr.mxu0 0.0
        %384 = vmatpush1.msra.mxu0 0.0
        %385 = vmatprep.subr.mxu0 0.0
        %386 = vmatpush1.msra.mxu0 0.0
        %387 = vmatprep.subr.mxu0 0.0
        %388 = vmatpush1.msra.mxu0 0.0
        %389 = vmatprep.subr.mxu0 0.0
        %390 = vmatpush1.msra.mxu0 0.0
        %391 = vmatprep.subr.mxu0 0.0
        %392 = vmatpush1.msra.mxu0 0.0
        %393 = vmatprep.subr.mxu0 0.0
        %394 = vmatpush1.msra.mxu0 0.0
        %395 = vmatprep.subr.mxu0 0.0
        %396 = vmatpush1.msra.mxu0 0.0
        %397 = vmatprep.subr.mxu0 0.0
        %398 = vmatpush1.msra.mxu0 0.0
        %399 = vmatprep.subr.mxu0 0.0
        %400 = vmatpush1.msra.mxu0 0.0
        %401 = vmatprep.subr.mxu0 0.0
        %402 = vmatpush1.msra.mxu0 0.0
        %403 = vmatprep.subr.mxu0 0.0
        %404 = vmatpush1.msra.mxu0 0.0
        %405 = vmatprep.subr.mxu0 0.0
        %406 = vmatpush1.msra.mxu0 0.0
        %407 = vmatprep.subr.mxu0 0.0
        %408 = vmatpush1.msra.mxu0 0.0
        %409 = vmatprep.subr.mxu0 0.0
        %410 = vmatpush1.msra.mxu0 0.0
        %411 = vmatprep.subr.mxu0 0.0
        %412 = vmatpush1.msra.mxu0 0.0
        %413 = vmatprep.subr.mxu0 0.0
        %414 = vmatpush1.msra.mxu0 0.0
        %415 = vmatprep.subr.mxu0 0.0
        %416 = vmatpush1.msra.mxu0 0.0
        %417 = vmatprep.subr.mxu0 0.0
        %418 = vmatpush1.msra.mxu0 0.0
        %419 = vmatprep.subr.mxu0 0.0
        %420 = vmatpush1.msra.mxu0 0.0
        %421 = vmatprep.subr.mxu0 0.0
        %422 = vmatpush1.msra.mxu0 0.0
        %423 = vmatprep.subr.mxu0 0.0
        %424 = vmatpush1.msra.mxu0 0.0
        %425 = vmatprep.subr.mxu0 0.0
        %426 = vmatpush1.msra.mxu0 0.0
        %427 = vmatprep.subr.mxu0 0.0
        %428 = vmatpush1.msra.mxu0 0.0
        %429 = vmatprep.subr.mxu0 0.0
        %430 = vmatpush1.msra.mxu0 0.0
        %431 = vmatprep.mubr.f32.mxu0 0.0
        %432 = vmatmul.mubr.f32.gmra.mrb[0].mxu0 %v359
        %v433 = vpop.f32.mrb[0].mxu0
        %v434 = vadd.f32 %v356, %v433
        %v435 = vpop.f32.mrb[0].mxu0
        %v436 = vadd.f32 %v356, %v435
        %437 = vdwg.mxu0
        %v438 = vxor.u32 %v434, 2147483648
        %v439 = vxor.u32 %v436, 2147483648
        %v440 = vmul.f32 %v438, 1.442695
        %v441 = vpow.pop %v440
        %v442 = vmul.f32 %v439, 1.442695
        %v443 = vpow.pop %v442
        %v444 = vadd.f32 %v441, 1.0
        %v445 = vadd.f32 %v443, 1.0
        %v446 = vrcp.pop %v444
        %v447 = vmul.f32 1.0, %v446
        %v448 = vrcp.pop %v445
        %v449 = vmul.f32 1.0, %v448
        %v452 = vcombine.low %v447, %v449
        %v454 = vunpack.c.l.s4 1966171168
        %v455 = vunpack.c.0.s8 %v454
        %v456 = vlaneseq
        %v457 = vshrl.u32 %v456, 7
        %v458 = vsub.s32 %v455, %v457
        %v459 = vrot.slane %v452, %v458
        %v461 = vunpack.c.l.s4 1966171168
        %v462 = vunpack.c.0.s8 %v461
        %v463 = vlaneseq
        %v464 = vshrl.u32 %v463, 7
        %v465 = vsub.s32 %v462, %v464
        %v466 = vrot.slane %v459, %v465
        %v468 = vlaneseq
        %vm469 = vcmp.ge.s32.totalorder %v468, 0
        %vm470 = vcmp.lt.s32.totalorder %v468, 256
        %vm471 = vmand %vm469, %vm470
        %472 = vst.msk [vmem:[%s137] sm:$0x3] %vm471, %v466
        %s473 = sand.u32 %s71, 1
        %s474 = scalar_lea.sflag [#allocation3], %s473
        %s475 = sand.u32 %s71, 1
        %s476 = smul.addr %s475, 2
        %s477 = scalar_lea.vmem [#allocation2], %s476
        // Predicated region
        $region29: #{tpu_custom_call.1} parent=27 // pred_check
          %p478 = pneg %p81
        $region30: #{tpu_custom_call.1} parent=27 // pred_check_branch
          %480 = sbr.rel (%p478) target = $region32
        $region31: #{tpu_custom_call.1} parent=27 // pred_region
          %s481 = smul.u32 2, %s16
          %s483 = ssub.s32 32, 32
          %484 = vsyncadd %s474, %s483
          %s485 = smul.addr %s481, 16
          %s486 = scalar_lea.hbm %s2, %s485
          %s488 = sshll.u32 %s477, 4
          %s489 = int_to_ptr.vmem [resolvable:$true] %s488
          %491 = dma.vmem_to_hbm [thread:$0]  %s489, 32, %s486, %s474
        $region32: #{tpu_custom_call.1} parent=27 // pred_fallthru
          _
      $region28: #{tpu_custom_call.1} parent=5 // pred_fallthru
        _
      %p492 = scmp.le.s32.totalorder 2, %s11
      // Predicated region
      $region33: #{tpu_custom_call.1} parent=5 // pred_check
        %p493 = pneg %p492
      $region34: #{tpu_custom_call.1} parent=5 // pred_check_branch
        %495 = sbr.rel (%p493) target = $region36
      $region35: #{tpu_custom_call.1} parent=5 // pred_region
        %s496 = ssub.s32 %s11, 2
        // Predicated region
        $region37: #{tpu_custom_call.1} parent=35 // pred_check
          %p497 = pneg %p87
        $region38: #{tpu_custom_call.1} parent=35 // pred_check_branch
          %499 = sbr.rel (%p497) target = $region40
        $region39: #{tpu_custom_call.1} parent=35 // pred_region
          %s500 = sand.u32 %s72, 1
          %s501 = scalar_lea.sflag [#allocation3], %s500
          %s502 = sand.u32 %s72, 1
          %s503 = smul.addr %s502, 2
          %s504 = scalar_lea.vmem [#allocation2], %s503
          %505 = dma.done %s501, 32
        $region40: #{tpu_custom_call.1} parent=35 // pred_fallthru
          _
      $region36: #{tpu_custom_call.1} parent=5 // pred_fallthru
        _
    $region6: #{tpu_custom_call.1} parent=1 // loop_footer
      %s15 = sadd.s32 1, %s11
    $region7: #{tpu_custom_call.1} parent=1 // loop_footer_branch
      %10 = sbr.rel target = $region3
    $region8: #{tpu_custom_call.1} parent=1 // loop_exit
      _
    %506 = vsyncpa [#allocation3], 1
    %s507 = scalar_lea.sflag [#allocation3], 1
    %508 = vsyncpa %s507, 1

</llo_original>
